<compile_context>
chip_gen: v7x
topology: tpu7x:2x2x1
jax: 0.10.0
libtpu: 0.0.40
codegen_flags: <defaults>
</compile_context>

<pallas_src>
import jax
import jax.numpy as jnp
import numpy as np
from jax import lax
from jax.experimental import pallas as pl
from jax.experimental.pallas import tpu as pltpu

LANE = 128          # grid cells per lane tile
R_C = 8             # sublane depth of one compute chunk (one f32 vreg per value)
MAX_R_BLK = 64      # max sublane rows per DMA block (6*64*128*4 B ~= 196 KiB / tensor)
NUM_TERMS = 6       # noobj_bce, noobj_cnt, obj_bce, obj_cnt, box_se, class_ce

LAMBDA_CLASS = 1.0
LAMBDA_NOOBJ = 5.0
LAMBDA_OBJ = 10.0
LAMBDA_BOX = 1.0


def _make_kernel(n_chunks, n_cls):
    """Build the kernel for a given static chunk count / number of class logits."""

    def kernel(anc_ref, p_ref, t_ref, out_ref):
        a = pl.program_id(0)      # anchor index
        blk = pl.program_id(1)    # block index along the cell axis

        @pl.when(blk == 0)
        def _():
            out_ref[...] = jnp.zeros_like(out_ref)

        # Per-anchor scalars from the tiny SMEM table (no (2, N) broadcast slab).
        aw = anc_ref[a, 0]
        ah = anc_ref[a, 1]
        inv_aw = 1.0 / aw
        inv_ah = 1.0 / ah

        zero = jnp.zeros((R_C, LANE), jnp.float32)

        def chunk(c, carry):
            s_nb, s_nc, s_ob, s_oc, s_bx, s_ce = carry
            rows = pl.ds(pl.multiple_of(c * R_C, R_C), R_C)

            t0 = t_ref[0, rows, :]
            x = p_ref[0, rows, :]                      # objectness logit
            obj = (t0 == 1.0).astype(jnp.float32)
            noobj = (t0 == 0.0).astype(jnp.float32)    # padded cells carry -1 -> excluded

            # Shared softplus: bce_with_logits(x, y) = sp - x*y
            sp = jnp.maximum(x, 0.0) + jnp.log(1.0 + jnp.exp(-jnp.abs(x)))

            # Decoded box predictions.
            px = 1.0 / (1.0 + jnp.exp(-p_ref[1, rows, :]))
            py = 1.0 / (1.0 + jnp.exp(-p_ref[2, rows, :]))
            pw_logit = p_ref[3, rows, :]
            ph_logit = p_ref[4, rows, :]
            pw = jnp.exp(pw_logit) * aw
            ph = jnp.exp(ph_logit) * ah
            tx = t_ref[1, rows, :]
            ty = t_ref[2, rows, :]
            tw = t_ref[3, rows, :]
            th = t_ref[4, rows, :]

            # IoU (midpoint box format).
            iw = jnp.maximum(jnp.minimum(px + 0.5 * pw, tx + 0.5 * tw)
                             - jnp.maximum(px - 0.5 * pw, tx - 0.5 * tw), 0.0)
            ih = jnp.maximum(jnp.minimum(py + 0.5 * ph, ty + 0.5 * th)
                             - jnp.maximum(py - 0.5 * ph, ty - 0.5 * th), 0.0)
            inter = iw * ih
            union = jnp.abs(pw * ph) + jnp.abs(tw * th) - inter + 1e-6
            ious = inter * pl.reciprocal(union, approx=True)

            # Object / no-object BCE-with-logits (reusing sp).
            noobj_bce = sp * noobj
            obj_bce = (sp - x * (ious * t0)) * obj

            # Box MSE terms (sigmoid x/y vs target; raw w/h logits vs log(target/anchor)).
            tlog_w = jnp.log(1e-16 + tw * inv_aw)
            tlog_h = jnp.log(1e-16 + th * inv_ah)
            box_se = ((px - tx) ** 2 + (py - ty) ** 2
                      + (pw_logit - tlog_w) ** 2 + (ph_logit - tlog_h) ** 2) * obj

            # Class cross-entropy; statically skipped for a single class logit
            # (logsumexp == selected logit, so the loss is identically zero).
            if n_cls > 1:
                cls = [p_ref[5 + k, rows, :] for k in range(n_cls)]
                m = cls[0]
                for ck in cls[1:]:
                    m = jnp.maximum(m, ck)
                ssum = zero
                for ck in cls:
                    ssum = ssum + jnp.exp(ck - m)
                lse = m + jnp.log(ssum)
                label = t_ref[5, rows, :]
                sel = zero
                for k, ck in enumerate(cls):
                    sel = sel + jnp.where(label == float(k), ck, 0.0)
                s_ce = s_ce + (lse - sel) * obj

            return (s_nb + noobj_bce, s_nc + noobj, s_ob + obj_bce,
                    s_oc + obj, s_bx + box_se, s_ce)

        accs = lax.fori_loop(0, n_chunks, chunk,
                             (zero, zero, zero, zero, zero, zero), unroll=True)

        # One dense, lane-/sublane-aligned (48, 128) read-modify-write per grid step.
        out_ref[...] += jnp.concatenate(accs, axis=0)

    return kernel


@jax.jit
def yolo_loss_pallas(predictions, target, anchors):
    """predictions/target: (B, A, S, S, 5 + n_cls) f32, anchors: (A, 2) f32."""
    B, A, S1, S2, C = predictions.shape
    n_cls = C - 5
    # Drop the unused class channel when the class CE is identically zero (C == 6).
    c_in = 5 if n_cls == 1 else C
    M = B * S1 * S2

    # Channel-major, lane-dense relayout: (A, c_in, M).  XLA fuses slice+transpose+pad
    # into one producer pass; no anchor broadcast slab is materialized.
    p_flat = jnp.transpose(predictions[..., :c_in].astype(jnp.float32),
                           (1, 4, 0, 2, 3)).reshape(A, c_in, M)
    t_flat = jnp.transpose(target[..., :c_in].astype(jnp.float32),
                           (1, 4, 0, 2, 3)).reshape(A, c_in, M)

    tiles = pl.cdiv(M, LANE)
    r_blk = min(MAX_R_BLK, pl.cdiv(tiles, R_C) * R_C)   # sublane rows per DMA block
    n_tiles = pl.cdiv(tiles, r_blk) * r_blk
    pad = n_tiles * LANE - M
    if pad:
        p_flat = jnp.pad(p_flat, ((0, 0), (0, 0), (0, pad)))
        # Padded cells get objectness -1 -> neither obj nor noobj; other channels 0.
        t_pad = jnp.zeros((A, c_in, pad), jnp.float32).at[:, 0, :].set(-1.0)
        t_flat = jnp.concatenate([t_flat, t_pad], axis=-1)

    p_til = p_flat.reshape(A, c_in, n_tiles, LANE)
    t_til = t_flat.reshape(A, c_in, n_tiles, LANE)
    n_blocks = n_tiles // r_blk
    n_chunks = r_blk // R_C

    part = pl.pallas_call(
        _make_kernel(n_chunks, n_cls),
        out_shape=jax.ShapeDtypeStruct((A, NUM_TERMS * R_C, LANE), jnp.float32),
        grid_spec=pltpu.PrefetchScalarGridSpec(
            num_scalar_prefetch=0,
            grid=(A, n_blocks),
            in_specs=[
                pl.BlockSpec(memory_space=pltpu.MemorySpace.SMEM),           # anchors (A, 2)
                pl.BlockSpec((None, c_in, r_blk, LANE), lambda a, i: (a, 0, i, 0)),
                pl.BlockSpec((None, c_in, r_blk, LANE), lambda a, i: (a, 0, i, 0)),
            ],
            out_specs=pl.BlockSpec((None, NUM_TERMS * R_C, LANE),
                                   lambda a, i: (a, 0, 0)),
        ),
        compiler_params=pltpu.CompilerParams(
            dimension_semantics=("parallel", "arbitrary")),
    )(anchors.astype(jnp.float32), p_til, t_til)

    # Tiny final reduction + lambda-weighted combine (A * 48 * 128 floats).
    sums = jnp.sum(part.reshape(A, NUM_TERMS, R_C, LANE), axis=(0, 2, 3))
    noobj_loss = sums[0] / sums[1]
    obj_loss = sums[2] / sums[3]
    box_loss = sums[4] / (4.0 * sums[3])
    class_loss = sums[5] / sums[3]
    return (LAMBDA_BOX * box_loss + LAMBDA_OBJ * obj_loss
            + LAMBDA_NOOBJ * noobj_loss + LAMBDA_CLASS * class_loss)


# ---------------------------------------------------------------------------
# Pure-JAX mirror of the PyTorch Loss.forward, for verification only.
# ---------------------------------------------------------------------------
def _sigmoid_ref(x):
    return 1.0 / (1.0 + jnp.exp(-x))


def _bce_ref(x, y):
    return jnp.maximum(x, 0.0) - x * y + jnp.log(1.0 + jnp.exp(-jnp.abs(x)))


def reference_loss(pred, tgt, anchors):
    objf = (tgt[..., 0] == 1.0).astype(jnp.float32)
    noobjf = (tgt[..., 0] == 0.0).astype(jnp.float32)

    no_object_loss = jnp.sum(_bce_ref(pred[..., 0], 0.0) * noobjf) / jnp.sum(noobjf)

    anc = anchors.reshape(1, 3, 1, 1, 2)
    sxy = _sigmoid_ref(pred[..., 1:3])
    pwh = jnp.exp(pred[..., 3:5]) * anc
    pw, ph = pwh[..., 0], pwh[..., 1]
    px, py = sxy[..., 0], sxy[..., 1]
    tx, ty, tw, th = tgt[..., 1], tgt[..., 2], tgt[..., 3], tgt[..., 4]

    iw = jnp.maximum(jnp.minimum(px + pw / 2, tx + tw / 2) - jnp.maximum(px - pw / 2, tx - tw / 2), 0.0)
    ih = jnp.maximum(jnp.minimum(py + ph / 2, ty + th / 2) - jnp.maximum(py - ph / 2, ty - th / 2), 0.0)
    inter = iw * ih
    ious = inter / (jnp.abs(pw * ph) + jnp.abs(tw * th) - inter + 1e-6)

    object_loss = jnp.sum(_bce_ref(pred[..., 0], ious * tgt[..., 0]) * objf) / jnp.sum(objf)

    t_wh = jnp.log(1e-16 + tgt[..., 3:5] / anc)
    se = jnp.sum((sxy - tgt[..., 1:3]) ** 2, -1) + jnp.sum((pred[..., 3:5] - t_wh) ** 2, -1)
    box_loss = jnp.sum(se * objf) / (4.0 * jnp.sum(objf))

    logits = pred[..., 5:]
    lse = jax.scipy.special.logsumexp(logits, axis=-1)
    sel = jnp.take_along_axis(logits, tgt[..., 5:6].astype(jnp.int32), axis=-1)[..., 0]
    class_loss = jnp.sum((lse - sel) * objf) / jnp.sum(objf)

    return (LAMBDA_BOX * box_loss + LAMBDA_OBJ * object_loss
            + LAMBDA_NOOBJ * no_object_loss + LAMBDA_CLASS * class_loss)


if __name__ == "__main__":
    key = jax.random.PRNGKey(0)
    B, A, S = 2, 3, 8
    k1, k2, k3, k4 = jax.random.split(key, 4)

    predictions = jax.random.normal(k1, (B, A, S, S, 6), jnp.float32)

    obj_flag = (jax.random.uniform(k2, (B, A, S, S)) < 0.3).astype(jnp.float32)
    obj_flag = obj_flag.at[0, 0, 0, 0].set(1.0).at[0, 0, 0, 1].set(0.0)  # both classes present
    box_xy = jax.random.uniform(k3, (B, A, S, S, 2), minval=0.05, maxval=0.95)
    box_wh = jax.random.uniform(k4, (B, A, S, S, 2), minval=0.2, maxval=2.0)
    cls_lbl = jnp.zeros((B, A, S, S, 1), jnp.float32)   # single class -> label 0
    target = jnp.concatenate([obj_flag[..., None], box_xy, box_wh, cls_lbl], axis=-1)

    anchors = jnp.array([[1.0, 1.5], [2.0, 1.0], [0.5, 0.5]], jnp.float32)

    loss = jax.block_until_ready(yolo_loss_pallas(predictions, target, anchors))

    ref = reference_loss(predictions, target, anchors)
    np.testing.assert_allclose(np.asarray(loss), np.asarray(ref), rtol=2e-3, atol=2e-3)

    print("KERNEL_OK")
</pallas_src>

<mosaic_0001>
module attributes {stable_mosaic.version = 11 : i64} {
  func.func @kernel(%arg0: i32, %arg1: i32, %arg2: memref<3x2xf32, #tpu.memory_space<smem>>, %arg3: memref<1x5x8x128xf32, #tpu.memory_space<vmem>>, %arg4: memref<1x5x8x128xf32, #tpu.memory_space<vmem>>, %arg5: memref<1x48x128xf32, #tpu.memory_space<vmem>>) attributes {dimension_semantics = [#tpu.dimension_semantics<parallel>, #tpu.dimension_semantics<arbitrary>], iteration_bounds = array<i64: 3, 1>, scalar_prefetch = 0 : i64, scratch_operands = 0 : i64, tpu.core_type = #tpu.core_type<tc>, window_params = [{transform_indices = @transform_0, window_bounds = array<i64: 3, 2>}, {transform_indices = @transform_1, window_bounds = array<i64: 1, 5, 8, 128>}, {transform_indices = @transform_2, window_bounds = array<i64: 1, 5, 8, 128>}, {transform_indices = @transform_3, window_bounds = array<i64: 1, 48, 128>}]} {
    %c0_i32 = arith.constant 0 : i32
    %0 = arith.cmpi eq, %arg1, %c0_i32 : i32
    %1 = arith.extui %0 : i1 to i32
    %c0_i32_0 = arith.constant 0 : i32
    %2 = arith.cmpi ne, %1, %c0_i32_0 : i32
    scf.if %2 {
      %cst_61 = arith.constant 0.000000e+00 : f32
      %164 = vector.broadcast %cst_61 : f32 to vector<48x128xf32>
      %c0_62 = arith.constant 0 : index
      %c0_63 = arith.constant 0 : index
      %c0_64 = arith.constant 0 : index
      %165 = vector.load %arg5[%c0_62, %c0_63, %c0_64] : memref<1x48x128xf32, #tpu.memory_space<vmem>>, vector<1x48x128xf32>
      %166 = vector.shape_cast %165 : vector<1x48x128xf32> to vector<48x128xf32>
      %167 = vector.shape_cast %164 : vector<48x128xf32> to vector<1x48x128xf32>
      tpu.vector_store %arg5[%c0_62, %c0_63, %c0_64], %167 {strides = array<i32>} : memref<1x48x128xf32, #tpu.memory_space<vmem>>, vector<1x48x128xf32>,
    } else {
    }
    %3 = arith.index_cast %arg0 : i32 to index
    %c0 = arith.constant 0 : index
    %4 = memref.load %arg2[%3, %c0] : memref<3x2xf32, #tpu.memory_space<smem>>
    %5 = arith.index_cast %arg0 : i32 to index
    %c1 = arith.constant 1 : index
    %6 = memref.load %arg2[%5, %c1] : memref<3x2xf32, #tpu.memory_space<smem>>
    %cst = arith.constant 1.000000e+00 : f32
    %7 = arith.divf %cst, %4 : f32
    %cst_1 = arith.constant 1.000000e+00 : f32
    %8 = arith.divf %cst_1, %6 : f32
    %cst_2 = arith.constant 0.000000e+00 : f32
    %9 = vector.broadcast %cst_2 : f32 to vector<8x128xf32>
    %c0_i32_3 = arith.constant 0 : i32
    %c8_i32 = arith.constant 8 : i32
    %10 = arith.muli %c0_i32_3, %c8_i32 : i32
    %11 = tpu.assume_multiple %10, 8 : i32
    %c0_4 = arith.constant 0 : index
    %c0_5 = arith.constant 0 : index
    %12 = arith.index_cast %11 : i32 to index
    %c0_6 = arith.constant 0 : index
    %13 = vector.load %arg4[%c0_4, %c0_5, %12, %c0_6] : memref<1x5x8x128xf32, #tpu.memory_space<vmem>>, vector<1x1x8x128xf32>
    %14 = vector.shape_cast %13 : vector<1x1x8x128xf32> to vector<8x128xf32>
    %c0_7 = arith.constant 0 : index
    %c0_8 = arith.constant 0 : index
    %15 = arith.index_cast %11 : i32 to index
    %c0_9 = arith.constant 0 : index
    %16 = vector.load %arg3[%c0_7, %c0_8, %15, %c0_9] : memref<1x5x8x128xf32, #tpu.memory_space<vmem>>, vector<1x1x8x128xf32>
    %17 = vector.shape_cast %16 : vector<1x1x8x128xf32> to vector<8x128xf32>
    %cst_10 = arith.constant 1.000000e+00 : f32
    %18 = vector.broadcast %cst_10 : f32 to vector<8x128xf32>
    %19 = arith.cmpf oeq, %14, %18 : vector<8x128xf32>
    %20 = arith.extui %19 : vector<8x128xi1> to vector<8x128xi32>
    %21 = arith.sitofp %20 : vector<8x128xi32> to vector<8x128xf32>
    %cst_11 = arith.constant 0.000000e+00 : f32
    %22 = vector.broadcast %cst_11 : f32 to vector<8x128xf32>
    %23 = arith.cmpf oeq, %14, %22 : vector<8x128xf32>
    %24 = arith.extui %23 : vector<8x128xi1> to vector<8x128xi32>
    %25 = arith.sitofp %24 : vector<8x128xi32> to vector<8x128xf32>
    %cst_12 = arith.constant 0.000000e+00 : f32
    %26 = vector.broadcast %cst_12 : f32 to vector<8x128xf32>
    %27 = arith.maximumf %17, %26 : vector<8x128xf32>
    %28 = math.absf %17 : vector<8x128xf32>
    %cst_13 = arith.constant 0.000000e+00 : f32
    %29 = vector.broadcast %cst_13 : f32 to vector<8x128xf32>
    %30 = arith.subf %29, %28 : vector<8x128xf32>
    %31 = math.exp %30 : vector<8x128xf32>
    %cst_14 = arith.constant 1.000000e+00 : f32
    %32 = vector.broadcast %cst_14 : f32 to vector<8x128xf32>
    %33 = arith.addf %32, %31 : vector<8x128xf32>
    %34 = math.log %33 : vector<8x128xf32>
    %35 = arith.addf %27, %34 : vector<8x128xf32>
    %c0_15 = arith.constant 0 : index
    %c1_16 = arith.constant 1 : index
    %36 = arith.index_cast %11 : i32 to index
    %c0_17 = arith.constant 0 : index
    %37 = vector.load %arg3[%c0_15, %c1_16, %36, %c0_17] : memref<1x5x8x128xf32, #tpu.memory_space<vmem>>, vector<1x1x8x128xf32>
    %38 = vector.shape_cast %37 : vector<1x1x8x128xf32> to vector<8x128xf32>
    %cst_18 = arith.constant 0.000000e+00 : f32
    %39 = vector.broadcast %cst_18 : f32 to vector<8x128xf32>
    %40 = arith.subf %39, %38 : vector<8x128xf32>
    %41 = math.exp %40 : vector<8x128xf32>
    %cst_19 = arith.constant 1.000000e+00 : f32
    %42 = vector.broadcast %cst_19 : f32 to vector<8x128xf32>
    %43 = arith.addf %42, %41 : vector<8x128xf32>
    %cst_20 = arith.constant 1.000000e+00 : f32
    %44 = vector.broadcast %cst_20 : f32 to vector<8x128xf32>
    %45 = arith.divf %44, %43 : vector<8x128xf32>
    %c0_21 = arith.constant 0 : index
    %c2 = arith.constant 2 : index
    %46 = arith.index_cast %11 : i32 to index
    %c0_22 = arith.constant 0 : index
    %47 = vector.load %arg3[%c0_21, %c2, %46, %c0_22] : memref<1x5x8x128xf32, #tpu.memory_space<vmem>>, vector<1x1x8x128xf32>
    %48 = vector.shape_cast %47 : vector<1x1x8x128xf32> to vector<8x128xf32>
    %cst_23 = arith.constant 0.000000e+00 : f32
    %49 = vector.broadcast %cst_23 : f32 to vector<8x128xf32>
    %50 = arith.subf %49, %48 : vector<8x128xf32>
    %51 = math.exp %50 : vector<8x128xf32>
    %cst_24 = arith.constant 1.000000e+00 : f32
    %52 = vector.broadcast %cst_24 : f32 to vector<8x128xf32>
    %53 = arith.addf %52, %51 : vector<8x128xf32>
    %cst_25 = arith.constant 1.000000e+00 : f32
    %54 = vector.broadcast %cst_25 : f32 to vector<8x128xf32>
    %55 = arith.divf %54, %53 : vector<8x128xf32>
    %c0_26 = arith.constant 0 : index
    %c3 = arith.constant 3 : index
    %56 = arith.index_cast %11 : i32 to index
    %c0_27 = arith.constant 0 : index
    %57 = vector.load %arg3[%c0_26, %c3, %56, %c0_27] : memref<1x5x8x128xf32, #tpu.memory_space<vmem>>, vector<1x1x8x128xf32>
    %58 = vector.shape_cast %57 : vector<1x1x8x128xf32> to vector<8x128xf32>
    %c0_28 = arith.constant 0 : index
    %c4 = arith.constant 4 : index
    %59 = arith.index_cast %11 : i32 to index
    %c0_29 = arith.constant 0 : index
    %60 = vector.load %arg3[%c0_28, %c4, %59, %c0_29] : memref<1x5x8x128xf32, #tpu.memory_space<vmem>>, vector<1x1x8x128xf32>
    %61 = vector.shape_cast %60 : vector<1x1x8x128xf32> to vector<8x128xf32>
    %62 = math.exp %58 : vector<8x128xf32>
    %63 = vector.broadcast %4 : f32 to vector<8x128xf32>
    %64 = arith.mulf %62, %63 : vector<8x128xf32>
    %65 = math.exp %61 : vector<8x128xf32>
    %66 = vector.broadcast %6 : f32 to vector<8x128xf32>
    %67 = arith.mulf %65, %66 : vector<8x128xf32>
    %c0_30 = arith.constant 0 : index
    %c1_31 = arith.constant 1 : index
    %68 = arith.index_cast %11 : i32 to index
    %c0_32 = arith.constant 0 : index
    %69 = vector.load %arg4[%c0_30, %c1_31, %68, %c0_32] : memref<1x5x8x128xf32, #tpu.memory_space<vmem>>, vector<1x1x8x128xf32>
    %70 = vector.shape_cast %69 : vector<1x1x8x128xf32> to vector<8x128xf32>
    %c0_33 = arith.constant 0 : index
    %c2_34 = arith.constant 2 : index
    %71 = arith.index_cast %11 : i32 to index
    %c0_35 = arith.constant 0 : index
    %72 = vector.load %arg4[%c0_33, %c2_34, %71, %c0_35] : memref<1x5x8x128xf32, #tpu.memory_space<vmem>>, vector<1x1x8x128xf32>
    %73 = vector.shape_cast %72 : vector<1x1x8x128xf32> to vector<8x128xf32>
    %c0_36 = arith.constant 0 : index
    %c3_37 = arith.constant 3 : index
    %74 = arith.index_cast %11 : i32 to index
    %c0_38 = arith.constant 0 : index
    %75 = vector.load %arg4[%c0_36, %c3_37, %74, %c0_38] : memref<1x5x8x128xf32, #tpu.memory_space<vmem>>, vector<1x1x8x128xf32>
    %76 = vector.shape_cast %75 : vector<1x1x8x128xf32> to vector<8x128xf32>
    %c0_39 = arith.constant 0 : index
    %c4_40 = arith.constant 4 : index
    %77 = arith.index_cast %11 : i32 to index
    %c0_41 = arith.constant 0 : index
    %78 = vector.load %arg4[%c0_39, %c4_40, %77, %c0_41] : memref<1x5x8x128xf32, #tpu.memory_space<vmem>>, vector<1x1x8x128xf32>
    %79 = vector.shape_cast %78 : vector<1x1x8x128xf32> to vector<8x128xf32>
    %cst_42 = arith.constant 5.000000e-01 : f32
    %80 = vector.broadcast %cst_42 : f32 to vector<8x128xf32>
    %81 = arith.mulf %80, %64 : vector<8x128xf32>
    %82 = arith.addf %45, %81 : vector<8x128xf32>
    %cst_43 = arith.constant 5.000000e-01 : f32
    %83 = vector.broadcast %cst_43 : f32 to vector<8x128xf32>
    %84 = arith.mulf %83, %76 : vector<8x128xf32>
    %85 = arith.addf %70, %84 : vector<8x128xf32>
    %86 = arith.minimumf %82, %85 : vector<8x128xf32>
    %cst_44 = arith.constant 5.000000e-01 : f32
    %87 = vector.broadcast %cst_44 : f32 to vector<8x128xf32>
    %88 = arith.mulf %87, %64 : vector<8x128xf32>
    %89 = arith.subf %45, %88 : vector<8x128xf32>
    %cst_45 = arith.constant 5.000000e-01 : f32
    %90 = vector.broadcast %cst_45 : f32 to vector<8x128xf32>
    %91 = arith.mulf %90, %76 : vector<8x128xf32>
    %92 = arith.subf %70, %91 : vector<8x128xf32>
    %93 = arith.maximumf %89, %92 : vector<8x128xf32>
    %94 = arith.subf %86, %93 : vector<8x128xf32>
    %cst_46 = arith.constant 0.000000e+00 : f32
    %95 = vector.broadcast %cst_46 : f32 to vector<8x128xf32>
    %96 = arith.maximumf %94, %95 : vector<8x128xf32>
    %cst_47 = arith.constant 5.000000e-01 : f32
    %97 = vector.broadcast %cst_47 : f32 to vector<8x128xf32>
    %98 = arith.mulf %97, %67 : vector<8x128xf32>
    %99 = arith.addf %55, %98 : vector<8x128xf32>
    %cst_48 = arith.constant 5.000000e-01 : f32
    %100 = vector.broadcast %cst_48 : f32 to vector<8x128xf32>
    %101 = arith.mulf %100, %79 : vector<8x128xf32>
    %102 = arith.addf %73, %101 : vector<8x128xf32>
    %103 = arith.minimumf %99, %102 : vector<8x128xf32>
    %cst_49 = arith.constant 5.000000e-01 : f32
    %104 = vector.broadcast %cst_49 : f32 to vector<8x128xf32>
    %105 = arith.mulf %104, %67 : vector<8x128xf32>
    %106 = arith.subf %55, %105 : vector<8x128xf32>
    %cst_50 = arith.constant 5.000000e-01 : f32
    %107 = vector.broadcast %cst_50 : f32 to vector<8x128xf32>
    %108 = arith.mulf %107, %79 : vector<8x128xf32>
    %109 = arith.subf %73, %108 : vector<8x128xf32>
    %110 = arith.maximumf %106, %109 : vector<8x128xf32>
    %111 = arith.subf %103, %110 : vector<8x128xf32>
    %cst_51 = arith.constant 0.000000e+00 : f32
    %112 = vector.broadcast %cst_51 : f32 to vector<8x128xf32>
    %113 = arith.maximumf %111, %112 : vector<8x128xf32>
    %114 = arith.mulf %96, %113 : vector<8x128xf32>
    %115 = arith.mulf %64, %67 : vector<8x128xf32>
    %116 = math.absf %115 : vector<8x128xf32>
    %117 = arith.mulf %76, %79 : vector<8x128xf32>
    %118 = math.absf %117 : vector<8x128xf32>
    %119 = arith.addf %116, %118 : vector<8x128xf32>
    %120 = arith.subf %119, %114 : vector<8x128xf32>
    %cst_52 = arith.constant 9.99999997E-7 : f32
    %121 = vector.broadcast %cst_52 : f32 to vector<8x128xf32>
    %122 = arith.addf %120, %121 : vector<8x128xf32>
    %123 = tpu.reciprocal %122 {approx = true} : vector<8x128xf32> -> vector<8x128xf32>
    %124 = arith.mulf %114, %123 : vector<8x128xf32>
    %125 = arith.mulf %35, %25 : vector<8x128xf32>
    %126 = arith.mulf %124, %14 : vector<8x128xf32>
    %127 = arith.mulf %17, %126 : vector<8x128xf32>
    %128 = arith.subf %35, %127 : vector<8x128xf32>
    %129 = arith.mulf %128, %21 : vector<8x128xf32>
    %130 = vector.broadcast %7 : f32 to vector<8x128xf32>
    %131 = arith.mulf %76, %130 : vector<8x128xf32>
    %cst_53 = arith.constant 1.000000e-16 : f32
    %132 = vector.broadcast %cst_53 : f32 to vector<8x128xf32>
    %133 = arith.addf %132, %131 : vector<8x128xf32>
    %134 = math.log %133 : vector<8x128xf32>
    %135 = vector.broadcast %8 : f32 to vector<8x128xf32>
    %136 = arith.mulf %79, %135 : vector<8x128xf32>
    %cst_54 = arith.constant 1.000000e-16 : f32
    %137 = vector.broadcast %cst_54 : f32 to vector<8x128xf32>
    %138 = arith.addf %137, %136 : vector<8x128xf32>
    %139 = math.log %138 : vector<8x128xf32>
    %140 = arith.subf %45, %70 : vector<8x128xf32>
    %141 = arith.mulf %140, %140 : vector<8x128xf32>
    %142 = arith.subf %55, %73 : vector<8x128xf32>
    %143 = arith.mulf %142, %142 : vector<8x128xf32>
    %144 = arith.addf %141, %143 : vector<8x128xf32>
    %145 = arith.subf %58, %134 : vector<8x128xf32>
    %146 = arith.mulf %145, %145 : vector<8x128xf32>
    %147 = arith.addf %144, %146 : vector<8x128xf32>
    %148 = arith.subf %61, %139 : vector<8x128xf32>
    %149 = arith.mulf %148, %148 : vector<8x128xf32>
    %150 = arith.addf %147, %149 : vector<8x128xf32>
    %151 = arith.mulf %150, %21 : vector<8x128xf32>
    %152 = arith.addf %9, %125 : vector<8x128xf32>
    %153 = arith.addf %9, %25 : vector<8x128xf32>
    %154 = arith.addf %9, %129 : vector<8x128xf32>
    %155 = arith.addf %9, %21 : vector<8x128xf32>
    %156 = arith.addf %9, %151 : vector<8x128xf32>
    %c1_i32 = arith.constant 1 : i32
    %c0_55 = arith.constant 0 : index
    %c0_56 = arith.constant 0 : index
    %c0_57 = arith.constant 0 : index
    %157 = vector.load %arg5[%c0_55, %c0_56, %c0_57] : memref<1x48x128xf32, #tpu.memory_space<vmem>>, vector<1x48x128xf32>
    %158 = vector.shape_cast %157 : vector<1x48x128xf32> to vector<48x128xf32>
    %159 = tpu.concatenate %152, %153, %154, %155, %156, %9 in 0 : vector<8x128xf32>, vector<8x128xf32>, vector<8x128xf32>, vector<8x128xf32>, vector<8x128xf32>, vector<8x128xf32> -> vector<48x128xf32>
    %160 = arith.addf %158, %159 : vector<48x128xf32>
    %c0_58 = arith.constant 0 : index
    %c0_59 = arith.constant 0 : index
    %c0_60 = arith.constant 0 : index
    %161 = vector.load %arg5[%c0_58, %c0_59, %c0_60] : memref<1x48x128xf32, #tpu.memory_space<vmem>>, vector<1x48x128xf32>
    %162 = vector.shape_cast %161 : vector<1x48x128xf32> to vector<48x128xf32>
    %163 = vector.shape_cast %160 : vector<48x128xf32> to vector<1x48x128xf32>
    tpu.vector_store %arg5[%c0_58, %c0_59, %c0_60], %163 {strides = array<i32>} : memref<1x48x128xf32, #tpu.memory_space<vmem>>, vector<1x48x128xf32>,
    return
  }
  func.func @transform_0(%arg0: i32, %arg1: i32) -> (i32, i32) {
    %c0_i32 = arith.constant 0 : i32
    %c0_i32_0 = arith.constant 0 : i32
    %c0_i32_1 = arith.constant 0 : i32
    return %c0_i32, %c0_i32_0 : i32, i32
  }
  func.func @transform_1(%arg0: i32, %arg1: i32) -> (i32, i32, i32, i32) {
    %c0_i32 = arith.constant 0 : i32
    %c0_i32_0 = arith.constant 0 : i32
    %c0_i32_1 = arith.constant 0 : i32
    return %arg0, %c0_i32, %arg1, %c0_i32_0 : i32, i32, i32, i32
  }
  func.func @transform_2(%arg0: i32, %arg1: i32) -> (i32, i32, i32, i32) {
    %c0_i32 = arith.constant 0 : i32
    %c0_i32_0 = arith.constant 0 : i32
    %c0_i32_1 = arith.constant 0 : i32
    return %arg0, %c0_i32, %arg1, %c0_i32_0 : i32, i32, i32, i32
  }
  func.func @transform_3(%arg0: i32, %arg1: i32) -> (i32, i32, i32) {
    %c0_i32 = arith.constant 0 : i32
    %c0_i32_0 = arith.constant 0 : i32
    %c0_i32_1 = arith.constant 0 : i32
    return %arg0, %c0_i32, %c0_i32_0 : i32, i32, i32
  }
}

</mosaic_0001>

<llo_original>
// kernel: yolo_loss_pallas.1
$region0: #{yolo_loss_pallas.1}
  #allocation0 [shape = 'u32[]', space=smem, size = 0x4, offset = 0x4, fixed_abs, tag = 'smem constant byte address 0x4 - core index']
  #allocation1 [shape = 'u32[144,128]{1,0:T(1,128)}', space=vmem, size = 0x12000, scoped, tag = 'internal scratch']
  %s0 = inlined_call_operand.vmem [shape: f32[3,2], index: 0, kind: input, shape index: {}]
  %s1 = inlined_call_operand.vmem [shape: f32[3,5,8,128], index: 1, kind: input, shape index: {}]
  %s2 = inlined_call_operand.vmem [shape: f32[3,5,8,128], index: 2, kind: input, shape index: {}]
  %s3 = inlined_call_operand.vmem [shape: f32[3,48,128], index: 3, kind: output, shape index: {}]
  %s4 = sld [smem:[#allocation0]]
  $region53: #{yolo_loss_pallas.1} parent=0
    _
  %s6 = ssub.s32 1, %s4
  %s7 = scalar_select 0, %s6, %s4
  $region1: #{yolo_loss_pallas.1} parent=0
    #allocation2 [shape = 'u8[2048]{0}', space=smem, size = 0x800, scoped, tag = 'input window, operand 0, single buffered']
    #allocation3 [shape = 's32[2]{0}', space=sflag, size = 0x8, scoped, tag = 'scoped memory for yolo_loss_pallas.1']
    %8 = vsyncpa [#allocation3], 0
    loop: start=0, step=1, limit=5
    $region2: #{yolo_loss_pallas.1} parent=1 // loop_pre_header
      _
    $region3: #{yolo_loss_pallas.1} parent=1 // loop_header
      %s10 = sphi 0, %s14
      %p11 = scmp.ge.s32.totalorder %s10, 5
      %s17 = sphi 0, %s29
      %s18 = sphi 0, %s25
      %s19 = sphi 0, %s17
      %s20 = sphi 0, %s18
      %s21 = sphi 0, %s19
      %s22 = sphi 0, %s20
      %s30 = sphi 0, %s30
      %s32 = sphi 0, %s30
      %s33 = sphi 0, %s32
      %s47 = sphi 0, %s33
      %s55 = sphi 0, %s57
      %s58 = sphi 0, %s55
      %s59 = sphi 0, %s58
      %s75 = sphi 0, %s59
      %s83 = sphi 0, %s85
      %s86 = sphi 0, %s83
      %s87 = sphi 0, %s86
      %s103 = sphi 0, %s87
      %s109 = sphi 0, %s111
      %s112 = sphi 0, %s109
      %s113 = sphi 0, %s112
      %s129 = sphi 0, %s113
    $region4: #{yolo_loss_pallas.1} parent=1 // loop_header_branch
      %13 = sbr.rel (%p11) target = $region8
    $region5: #{yolo_loss_pallas.1} parent=1 // loop_body
      %s15 = ssub.s32 %s10, 1
      %s16 = ssub.s32 %s10, 2
      %s23 = sadd.s32 1, %s18
      %p24 = scmp.ge.s32.totalorder %s23, 1
      %s25 = scalar_select %p24, 0, %s23
      %s26 = sadd.s32 1, %s17
      %s27 = scalar_select %p24, %s26, %s17
      %p28 = scmp.ge.s32.totalorder %s27, 3
      %s29 = scalar_select %p28, 0, %s27
      %s31 = sadd.s32 %s30, 1
      %p34 = scmp.eq.s32.totalorder %s10, 2
      %p35 = scmp.ne.s32.totalorder %s30, %s32
      %p36 = scmp.eq.s32.totalorder %s10, 0
      %p37 = por %p35, %p36
      %p38 = scmp.ne.s32.totalorder %s30, %s32
      %p39 = scmp.eq.s32.totalorder %s15, 2
      %p40 = por %p38, %p39
      %p41 = scmp.ne.s32.totalorder %s32, %s33
      %p42 = scmp.eq.s32.totalorder %s15, 0
      %p43 = por %p41, %p42
      %p44 = scmp.ne.s32.totalorder %s32, %s33
      %p45 = scmp.eq.s32.totalorder %s16, 2
      %p46 = por %p44, %p45
      %p48 = scmp.ne.s32.totalorder %s33, %s47
      %p49 = scmp.eq.s32.totalorder %s16, 0
      %p50 = por %p48, %p49
      %s51 = ssub.s32 %s17, %s29
      %s52 = ssub.s32 %s18, %s25
      %s53 = sor.u32 %s51, %s52
      %p54 = scmp.eq.s32.totalorder %s53, 0
      %s56 = sadd.s32 %s55, 1
      %s57 = scalar_select %p54, %s55, %s56
      %p60 = pneg %p54
      %p61 = scmp.eq.s32.totalorder %s10, 2
      %p62 = por %p60, %p61
      %p63 = scmp.ne.s32.totalorder %s55, %s58
      %p64 = scmp.eq.s32.totalorder %s10, 0
      %p65 = por %p63, %p64
      %p66 = scmp.ne.s32.totalorder %s55, %s58
      %p67 = scmp.eq.s32.totalorder %s15, 2
      %p68 = por %p66, %p67
      %p69 = scmp.ne.s32.totalorder %s58, %s59
      %p70 = scmp.eq.s32.totalorder %s15, 0
      %p71 = por %p69, %p70
      %p72 = scmp.ne.s32.totalorder %s58, %s59
      %p73 = scmp.eq.s32.totalorder %s16, 2
      %p74 = por %p72, %p73
      %p76 = scmp.ne.s32.totalorder %s59, %s75
      %p77 = scmp.eq.s32.totalorder %s16, 0
      %p78 = por %p76, %p77
      %s79 = ssub.s32 %s17, %s29
      %s80 = ssub.s32 %s18, %s25
      %s81 = sor.u32 %s79, %s80
      %p82 = scmp.eq.s32.totalorder %s81, 0
      %s84 = sadd.s32 %s83, 1
      %s85 = scalar_select %p82, %s83, %s84
      %p88 = pneg %p82
      %p89 = scmp.eq.s32.totalorder %s10, 2
      %p90 = por %p88, %p89
      %p91 = scmp.ne.s32.totalorder %s83, %s86
      %p92 = scmp.eq.s32.totalorder %s10, 0
      %p93 = por %p91, %p92
      %p94 = scmp.ne.s32.totalorder %s83, %s86
      %p95 = scmp.eq.s32.totalorder %s15, 2
      %p96 = por %p94, %p95
      %p97 = scmp.ne.s32.totalorder %s86, %s87
      %p98 = scmp.eq.s32.totalorder %s15, 0
      %p99 = por %p97, %p98
      %p100 = scmp.ne.s32.totalorder %s86, %s87
      %p101 = scmp.eq.s32.totalorder %s16, 2
      %p102 = por %p100, %p101
      %p104 = scmp.ne.s32.totalorder %s87, %s103
      %p105 = scmp.eq.s32.totalorder %s16, 0
      %p106 = por %p104, %p105
      %s107 = ssub.s32 %s17, %s29
      %p108 = scmp.eq.s32.totalorder %s107, 0
      %s110 = sadd.s32 %s109, 1
      %s111 = scalar_select %p108, %s109, %s110
      %p114 = pneg %p108
      %p115 = scmp.eq.s32.totalorder %s10, 2
      %p116 = por %p114, %p115
      %p117 = scmp.ne.s32.totalorder %s109, %s112
      %p118 = scmp.eq.s32.totalorder %s10, 0
      %p119 = por %p117, %p118
      %p120 = scmp.ne.s32.totalorder %s109, %s112
      %p121 = scmp.eq.s32.totalorder %s15, 2
      %p122 = por %p120, %p121
      %p123 = scmp.ne.s32.totalorder %s112, %s113
      %p124 = scmp.eq.s32.totalorder %s15, 0
      %p125 = por %p123, %p124
      %p126 = scmp.ne.s32.totalorder %s112, %s113
      %p127 = scmp.eq.s32.totalorder %s16, 2
      %p128 = por %p126, %p127
      %p130 = scmp.ne.s32.totalorder %s113, %s129
      %p131 = scmp.eq.s32.totalorder %s16, 0
      %p132 = por %p130, %p131
      %p133 = scmp.le.s32.totalorder 1, %s10
      %p134 = scmp.lt.s32.totalorder %s10, 4
      %p135 = pnand %p133, %p134
      %p136 = pneg %p135
      // Predicated region
      $region9: #{yolo_loss_pallas.1} parent=5 // pred_check
        _
      $region10: #{yolo_loss_pallas.1} parent=5 // pred_check_branch
        %138 = sbr.rel (%p135) target = $region12
      $region11: #{yolo_loss_pallas.1} parent=5 // pred_region
        %s139 = ssub.s32 %s10, 1
        // Predicated region
        $region13: #{yolo_loss_pallas.1} parent=11 // pred_check
          %p140 = pneg %p43
        $region14: #{yolo_loss_pallas.1} parent=11 // pred_check_branch
          %142 = sbr.rel (%p140) target = $region16
        $region15: #{yolo_loss_pallas.1} parent=11 // pred_region
          %s144 = ssub.s32 64, 64
          %145 = vsyncadd [#allocation3], %s144
          %s147 = sshll.u32 %s0, 4
          %s148 = int_to_ptr.vmem [resolvable:$true] %s147
          %150 = dma.vmem_to_smem %s148, 64, [#allocation2], [#allocation3]
        $region16: #{yolo_loss_pallas.1} parent=11 // pred_fallthru
          _
      $region12: #{yolo_loss_pallas.1} parent=5 // pred_fallthru
        _
      %p151 = scmp.lt.s32.totalorder %s10, 3
      // Predicated region
      $region17: #{yolo_loss_pallas.1} parent=5 // pred_check
        %p152 = pneg %p151
      $region18: #{yolo_loss_pallas.1} parent=5 // pred_check_branch
        %154 = sbr.rel (%p152) target = $region20
      $region19: #{yolo_loss_pallas.1} parent=5 // pred_region
        // Predicated region
        $region21: #{yolo_loss_pallas.1} parent=19 // pred_check
          %p155 = pneg %p65
        $region22: #{yolo_loss_pallas.1} parent=19 // pred_check_branch
          %157 = sbr.rel (%p155) target = $region24
        $region23: #{yolo_loss_pallas.1} parent=19 // pred_region
          %p158 = scmp.lt.s32.totalorder %s17, 2
          %s159 = scalar_select %p158, %s17, 2
          %p160 = scmp.lt.s32.totalorder %s18, 0
          %s161 = scalar_select %p160, %s18, 0
          %s162 = smul.addr %s159, 5
          %s163 = sadd.s32 %s161, %s162
          %s164 = smul.addr %s163, 8
          %s165 = scalar_lea.vmem %s1, %s164
        $region24: #{yolo_loss_pallas.1} parent=19 // pred_fallthru
          _
        // Predicated region
        $region25: #{yolo_loss_pallas.1} parent=19 // pred_check
          %p166 = pneg %p93
        $region26: #{yolo_loss_pallas.1} parent=19 // pred_check_branch
          %168 = sbr.rel (%p166) target = $region28
        $region27: #{yolo_loss_pallas.1} parent=19 // pred_region
          %p169 = scmp.lt.s32.totalorder %s17, 2
          %s170 = scalar_select %p169, %s17, 2
          %p171 = scmp.lt.s32.totalorder %s18, 0
          %s172 = scalar_select %p171, %s18, 0
          %s173 = smul.addr %s170, 5
          %s174 = sadd.s32 %s172, %s173
          %s175 = smul.addr %s174, 8
          %s176 = scalar_lea.vmem %s2, %s175
        $region28: #{yolo_loss_pallas.1} parent=19 // pred_fallthru
          _
      $region20: #{yolo_loss_pallas.1} parent=5 // pred_fallthru
        _
      %p177 = scmp.le.s32.totalorder 1, %s10
      %p178 = scmp.lt.s32.totalorder %s10, 4
      %p179 = pnand %p177, %p178
      %p180 = pneg %p179
      // Predicated region
      $region29: #{yolo_loss_pallas.1} parent=5 // pred_check
        _
      $region30: #{yolo_loss_pallas.1} parent=5 // pred_check_branch
        %182 = sbr.rel (%p179) target = $region32
      $region31: #{yolo_loss_pallas.1} parent=5 // pred_region
        %s183 = ssub.s32 %s10, 1
        // Predicated region
        $region33: #{yolo_loss_pallas.1} parent=31 // pred_check
          %p184 = pneg %p43
        $region34: #{yolo_loss_pallas.1} parent=31 // pred_check_branch
          %186 = sbr.rel (%p184) target = $region36
        $region35: #{yolo_loss_pallas.1} parent=31 // pred_region
          %187 = dma.done [#allocation3], 64
        $region36: #{yolo_loss_pallas.1} parent=31 // pred_fallthru
          _
        %188 = sfence
        %p189 = pneg %p43
        %p190 = pneg %p40
        %p191 = scmp.lt.s32.totalorder %s19, 2
        %s192 = scalar_select %p191, %s19, 2
        %p193 = scmp.lt.s32.totalorder %s20, 0
        %s194 = scalar_select %p193, %s20, 0
        %s195 = smul.addr %s192, 5
        %s196 = sadd.s32 %s194, %s195
        %s197 = smul.addr %s196, 8
        %s198 = scalar_lea.vmem %s1, %s197
        %p199 = pneg %p71
        %p200 = pneg %p68
        %p201 = scmp.lt.s32.totalorder %s19, 2
        %s202 = scalar_select %p201, %s19, 2
        %p203 = scmp.lt.s32.totalorder %s20, 0
        %s204 = scalar_select %p203, %s20, 0
        %s205 = smul.addr %s202, 5
        %s206 = sadd.s32 %s204, %s205
        %s207 = smul.addr %s206, 8
        %s208 = scalar_lea.vmem %s2, %s207
        %p209 = pneg %p99
        %p210 = pneg %p96
        %p211 = pneg %p125
        %p212 = pneg %p122
        %p213 = scmp.lt.s32.totalorder %s19, 2
        %s214 = scalar_select %p213, %s19, 2
        %s215 = smul.addr %s214, 6
        %s216 = smul.addr %s215, 8
        %s217 = scalar_lea.vmem %s3, %s216
        %p218 = scmp.lt.s32.totalorder %s19, 2
        %s219 = scalar_select %p218, %s19, 2
        %p220 = scmp.lt.s32.totalorder %s20, 0
        %s221 = scalar_select %p220, %s20, 0
        %s222 = smul.addr %s219, 5
        %s223 = sadd.s32 %s221, %s222
        %s224 = smul.addr %s223, 8
        %s225 = scalar_lea.vmem %s1, %s224
        %p226 = scmp.lt.s32.totalorder %s19, 2
        %s227 = scalar_select %p226, %s19, 2
        %p228 = scmp.lt.s32.totalorder %s20, 0
        %s229 = scalar_select %p228, %s20, 0
        %s230 = smul.addr %s227, 5
        %s231 = sadd.s32 %s229, %s230
        %s232 = smul.addr %s231, 8
        %s233 = scalar_lea.vmem %s2, %s232
        %p234 = scmp.lt.s32.totalorder %s19, 2
        %s235 = scalar_select %p234, %s19, 2
        %s236 = smul.addr %s235, 6
        %s237 = smul.addr %s236, 8
        %s238 = scalar_lea.vmem %s3, %s237
        %p239 = scmp.eq.s32.totalorder %s20, 0
        // Predicated region
        $region37: #{yolo_loss_pallas.1} parent=31 // pred_check
          %p240 = pneg %p239
        $region38: #{yolo_loss_pallas.1} parent=31 // pred_check_branch
          %242 = sbr.rel (%p240) target = $region40
        $region39: #{yolo_loss_pallas.1} parent=31 // pred_region
          %243 = vst [vmem:[%s238] sm:$0xff] 0.0
          %244 = vst [vmem:[%s238 + $0x8] sm:$0xff] 0.0
          %245 = vst [vmem:[%s238 + $0x10] sm:$0xff] 0.0
          %246 = vst [vmem:[%s238 + $0x18] sm:$0xff] 0.0
          %247 = vst [vmem:[%s238 + $0x20] sm:$0xff] 0.0
          %248 = vst [vmem:[%s238 + $0x28] sm:$0xff] 0.0
        $region40: #{yolo_loss_pallas.1} parent=31 // pred_fallthru
          _
        %s249 = smul.u32 %s19, 128
        %s250 = sld [smem:[#allocation2 + %s249]]
        %s251 = sadd.s32 %s249, 1
        %s252 = sld [smem:[#allocation2 + %s251]]
        %v253 = vstv %s250
        %v254 = vrcp.pop %v253
        %s255 = vtos %v254
        %v256 = vstv %s252
        %v257 = vrcp.pop %v256
        %s258 = vtos %v257
        %v259 = vld [vmem:[%s233] sm:$0xff]
        %v260 = vld [vmem:[%s225] sm:$0xff]
        %vm261 = vcmp.eq.f32.partialorder %v259, 1.0
        %v262 = vsel %vm261, 1, 0
        %v263 = vcvt.s32.f32 %v262
        %vm264 = vcmp.eq.f32.partialorder %v259, 0.0
        %v265 = vsel %vm264, 1, 0
        %v266 = vcvt.s32.f32 %v265
        %v267 = vmax.f32 %v260, 0.0
        %v268 = vand.u32 2147483647, %v260
        %v269 = vsub.f32 0.0, %v268
        %v270 = vmul.f32 %v269, 1.442695
        %v271 = vpow.pop %v270
        %v272 = vadd.f32 %v271, 1.0
        %v273 = vlog2.pop %v272
        %v274 = vmul.f32 %v273, 0.6931472
        %v275 = vadd.f32 %v267, %v274
        %s276 = sadd.s32 0, 8
        %s277 = scalar_lea.vmem %s225, %s276
        %v278 = vld [vmem:[%s277] sm:$0xff]
        %v279 = vsub.f32 0.0, %v278
        %v280 = vmul.f32 %v279, 1.442695
        %v281 = vpow.pop %v280
        %v282 = vadd.f32 %v281, 1.0
        %v283 = vrcp.pop %v282
        %v284 = vmul.f32 1.0, %v283
        %s285 = sadd.s32 0, 16
        %s286 = scalar_lea.vmem %s225, %s285
        %v287 = vld [vmem:[%s286] sm:$0xff]
        %v288 = vsub.f32 0.0, %v287
        %v289 = vmul.f32 %v288, 1.442695
        %v290 = vpow.pop %v289
        %v291 = vadd.f32 %v290, 1.0
        %v292 = vrcp.pop %v291
        %v293 = vmul.f32 1.0, %v292
        %s294 = sadd.s32 0, 24
        %s295 = scalar_lea.vmem %s225, %s294
        %v296 = vld [vmem:[%s295] sm:$0xff]
        %s297 = sadd.s32 0, 32
        %s298 = scalar_lea.vmem %s225, %s297
        %v299 = vld [vmem:[%s298] sm:$0xff]
        %v300 = vmul.f32 %v296, 1.442695
        %v301 = vpow.pop %v300
        %v302 = vstv %s250
        %v303 = vmul.f32 %v301, %v302
        %v304 = vmul.f32 %v299, 1.442695
        %v305 = vpow.pop %v304
        %v306 = vstv %s252
        %v307 = vmul.f32 %v305, %v306
        %s308 = scalar_lea.vmem %s233, %s276
        %v309 = vld [vmem:[%s308] sm:$0xff]
        %s310 = scalar_lea.vmem %s233, %s285
        %v311 = vld [vmem:[%s310] sm:$0xff]
        %s312 = scalar_lea.vmem %s233, %s294
        %v313 = vld [vmem:[%s312] sm:$0xff]
        %s314 = scalar_lea.vmem %s233, %s297
        %v315 = vld [vmem:[%s314] sm:$0xff]
        %v316 = vmul.f32 %v303, 0.5
        %v317 = vadd.f32 %v284, %v316
        %v318 = vmul.f32 %v313, 0.5
        %v319 = vadd.f32 %v309, %v318
        %v320 = vmin.f32 %v317, %v319
        %v321 = vsub.f32 %v284, %v316
        %v322 = vsub.f32 %v309, %v318
        %v323 = vmax.f32 %v321, %v322
        %v324 = vsub.f32 %v320, %v323
        %v325 = vmax.f32 %v324, 0.0
        %v326 = vmul.f32 %v307, 0.5
        %v327 = vadd.f32 %v293, %v326
        %v328 = vmul.f32 %v315, 0.5
        %v329 = vadd.f32 %v311, %v328
        %v330 = vmin.f32 %v327, %v329
        %v331 = vsub.f32 %v293, %v326
        %v332 = vsub.f32 %v311, %v328
        %v333 = vmax.f32 %v331, %v332
        %v334 = vsub.f32 %v330, %v333
        %v335 = vmax.f32 %v334, 0.0
        %v336 = vmul.f32 %v325, %v335
        %v337 = vmul.f32 %v303, %v307
        %v338 = vand.u32 2147483647, %v337
        %v339 = vmul.f32 %v313, %v315
        %v340 = vand.u32 2147483647, %v339
        %v341 = vadd.f32 %v338, %v340
        %v342 = vsub.f32 %v341, %v336
        %v343 = vadd.f32 %v342, 1e-06
        %v344 = vrcp.pop %v343
        %v345 = vmul.f32 %v336, %v344
        %v346 = vmul.f32 %v275, %v266
        %v347 = vmul.f32 %v345, %v259
        %v348 = vmul.f32 %v260, %v347
        %v349 = vsub.f32 %v275, %v348
        %v350 = vmul.f32 %v349, %v263
        %v351 = vstv %s255
        %v352 = vmul.f32 %v313, %v351
        %v353 = vadd.f32 %v352, 1e-16
        %v354 = vlog2.pop %v353
        %v355 = vmul.f32 %v354, 0.6931472
        %v356 = vstv %s258
        %v357 = vmul.f32 %v315, %v356
        %v358 = vadd.f32 %v357, 1e-16
        %v359 = vlog2.pop %v358
        %v360 = vmul.f32 %v359, 0.6931472
        %v361 = vsub.f32 %v284, %v309
        %v362 = vmul.f32 %v361, %v361
        %v363 = vsub.f32 %v293, %v311
        %v364 = vmul.f32 %v363, %v363
        %v365 = vadd.f32 %v362, %v364
        %v366 = vsub.f32 %v296, %v355
        %v367 = vmul.f32 %v366, %v366
        %v368 = vadd.f32 %v365, %v367
        %v369 = vsub.f32 %v299, %v360
        %v370 = vmul.f32 %v369, %v369
        %v371 = vadd.f32 %v368, %v370
        %v372 = vmul.f32 %v371, %v263
        %v373 = vadd.f32 %v346, 0.0
        %v374 = vadd.f32 %v266, 0.0
        %v375 = vadd.f32 %v350, 0.0
        %v376 = vadd.f32 %v263, 0.0
        %v377 = vadd.f32 %v372, 0.0
        %v378 = vld [vmem:[%s238] sm:$0xff]
        %v379 = vld [vmem:[%s238 + $0x8] sm:$0xff]
        %v380 = vld [vmem:[%s238 + $0x10] sm:$0xff]
        %v381 = vld [vmem:[%s238 + $0x18] sm:$0xff]
        %v382 = vld [vmem:[%s238 + $0x20] sm:$0xff]
        %v383 = vld [vmem:[%s238 + $0x28] sm:$0xff]
        %v384 = vadd.f32 %v378, %v373
        %v385 = vadd.f32 %v379, %v374
        %v386 = vadd.f32 %v380, %v375
        %v387 = vadd.f32 %v381, %v376
        %v388 = vadd.f32 %v382, %v377
        %v389 = vadd.f32 %v383, 0.0
        %390 = vst [vmem:[%s238] sm:$0xff] %v384
        %391 = vst [vmem:[%s238 + $0x8] sm:$0xff] %v385
        %392 = vst [vmem:[%s238 + $0x10] sm:$0xff] %v386
        %393 = vst [vmem:[%s238 + $0x18] sm:$0xff] %v387
        %394 = vst [vmem:[%s238 + $0x20] sm:$0xff] %v388
        %395 = vst [vmem:[%s238 + $0x28] sm:$0xff] %v389
        %p396 = scmp.lt.s32.totalorder %s19, 2
        %s397 = scalar_select %p396, %s19, 2
        %s398 = smul.addr %s397, 6
        %s399 = smul.addr %s398, 8
        %s400 = scalar_lea.vmem %s3, %s399
        // Predicated region
        $region41: #{yolo_loss_pallas.1} parent=31 // pred_check
          %p401 = pneg %p122
        $region42: #{yolo_loss_pallas.1} parent=31 // pred_check_branch
          %403 = sbr.rel (%p401) target = $region44
        $region43: #{yolo_loss_pallas.1} parent=31 // pred_region
          _
        $region44: #{yolo_loss_pallas.1} parent=31 // pred_fallthru
          _
      $region32: #{yolo_loss_pallas.1} parent=5 // pred_fallthru
        _
      %p404 = scmp.le.s32.totalorder 2, %s10
      // Predicated region
      $region45: #{yolo_loss_pallas.1} parent=5 // pred_check
        %p405 = pneg %p404
      $region46: #{yolo_loss_pallas.1} parent=5 // pred_check_branch
        %407 = sbr.rel (%p405) target = $region48
      $region47: #{yolo_loss_pallas.1} parent=5 // pred_region
        %s408 = ssub.s32 %s10, 2
        // Predicated region
        $region49: #{yolo_loss_pallas.1} parent=47 // pred_check
          %p409 = pneg %p128
        $region50: #{yolo_loss_pallas.1} parent=47 // pred_check_branch
          %411 = sbr.rel (%p409) target = $region52
        $region51: #{yolo_loss_pallas.1} parent=47 // pred_region
          %p412 = scmp.lt.s32.totalorder %s21, 2
          %s413 = scalar_select %p412, %s21, 2
          %s414 = smul.addr %s413, 6
          %s415 = smul.addr %s414, 8
          %s416 = scalar_lea.vmem %s3, %s415
        $region52: #{yolo_loss_pallas.1} parent=47 // pred_fallthru
          _
      $region48: #{yolo_loss_pallas.1} parent=5 // pred_fallthru
        _
    $region6: #{yolo_loss_pallas.1} parent=1 // loop_footer
      %s14 = sadd.s32 1, %s10
    $region7: #{yolo_loss_pallas.1} parent=1 // loop_footer_branch
      %9 = sbr.rel target = $region3
    $region8: #{yolo_loss_pallas.1} parent=1 // loop_exit
      _
    %417 = vsyncpa [#allocation3], 1
    %s418 = scalar_lea.sflag [#allocation3], 1
    %419 = vsyncpa %s418, 1

</llo_original>
